<compile_context>
chip_gen: v6e
topology: v6e:2x2x1
jax: 0.10.0
libtpu: 0.0.40
codegen_flags: <defaults>
</compile_context>

<pallas_src>
import functools
import math

import jax
import jax.numpy as jnp
import numpy as np
from jax.experimental import pallas as pl
from jax.experimental.pallas import tpu as pltpu


# ---------------------------------------------------------------------------
# Pallas kernels
# ---------------------------------------------------------------------------
def _linear_kernel(x_ref, w_ref, b_ref, o_ref, *, act):
    y = jnp.dot(x_ref[...], w_ref[...], preferred_element_type=jnp.float32)
    y = y + b_ref[...].astype(jnp.float32)
    if act == "relu":
        y = jnp.maximum(y, 0.0)
    elif act == "silu":
        y = y * (1.0 / (1.0 + jnp.exp(-y)))
    o_ref[...] = y.astype(o_ref.dtype)


def _sdpa_kernel(q_ref, k_ref, v_ref, o_ref, *, scale):
    q = q_ref[0, :, :].astype(jnp.float32) * scale          # (Lq, hd)
    k = k_ref[0, :, :].astype(jnp.float32)                  # (Lk, hd)
    v = v_ref[0, :, :].astype(jnp.float32)                  # (Lk, hd)
    # s = q @ k^T  (contract the head dim of both operands)
    s = jax.lax.dot_general(q, k, (((1,), (1,)), ((), ())),
                            preferred_element_type=jnp.float32)   # (Lq, Lk)
    s = s - jnp.max(s, axis=-1, keepdims=True)
    p = jnp.exp(s)
    denom = jnp.sum(p, axis=-1, keepdims=True)
    o = jnp.dot(p, v, preferred_element_type=jnp.float32) / denom
    o_ref[0, :, :] = o.astype(o_ref.dtype)


# ---------------------------------------------------------------------------
# Pallas wrappers
# ---------------------------------------------------------------------------
def _pick_row_tile(m):
    # Small problems: one block, no grid overhead. Big M: largest divisor tile.
    if m <= 1024:
        return m
    for t in (1024, 512, 256, 128, 64, 32, 16, 8):
        if m % t == 0:
            return t
    return m


def pallas_linear(x, w, b, act="none"):
    """act(x @ w + b).  x: [..., K], w: [K, N], b: [N]."""
    lead = x.shape[:-1]
    kd = x.shape[-1]
    n = w.shape[1]
    m = int(np.prod(lead)) if lead else 1
    x2 = x.reshape(m, kd)
    tm = _pick_row_tile(m)
    out = pl.pallas_call(
        functools.partial(_linear_kernel, act=act),
        out_shape=jax.ShapeDtypeStruct((m, n), x.dtype),
        grid=(m // tm,),
        in_specs=[
            pl.BlockSpec((tm, kd), lambda i: (i, 0)),
            pl.BlockSpec((kd, n), lambda i: (0, 0)),
            pl.BlockSpec((1, n), lambda i: (0, 0)),
        ],
        out_specs=pl.BlockSpec((tm, n), lambda i: (i, 0)),
        compiler_params=pltpu.CompilerParams(
            dimension_semantics=("parallel",)),
    )(x2, w, b.reshape(1, n))
    return out.reshape(*lead, n)


def pallas_sdpa(q, k, v, scale):
    """q: [BH, Lq, hd], k/v: [BH, Lk, hd] -> softmax(q k^T * scale) v."""
    bh, lq, hd = q.shape
    lk = k.shape[1]
    return pl.pallas_call(
        functools.partial(_sdpa_kernel, scale=scale),
        out_shape=jax.ShapeDtypeStruct((bh, lq, hd), q.dtype),
        grid=(bh,),
        in_specs=[
            pl.BlockSpec((1, lq, hd), lambda i: (i, 0, 0)),
            pl.BlockSpec((1, lk, hd), lambda i: (i, 0, 0)),
            pl.BlockSpec((1, lk, hd), lambda i: (i, 0, 0)),
        ],
        out_specs=pl.BlockSpec((1, lq, hd), lambda i: (i, 0, 0)),
        compiler_params=pltpu.CompilerParams(
            dimension_semantics=("parallel",)),
    )(q, k, v)


# ---------------------------------------------------------------------------
# Pure-JAX references (for correctness check of the Pallas path)
# ---------------------------------------------------------------------------
def _linear_ref(x, w, b, act="none"):
    y = jnp.dot(x, w) + b
    if act == "relu":
        y = jnp.maximum(y, 0.0)
    elif act == "silu":
        y = y * (1.0 / (1.0 + jnp.exp(-y)))
    return y


def _sdpa_ref(q, k, v, scale):
    s = jnp.einsum("bqd,bkd->bqk", q * scale, k)
    p = jax.nn.softmax(s, axis=-1)
    return jnp.einsum("bqk,bkd->bqd", p, v)


# ---------------------------------------------------------------------------
# Model forward (mirrors the PyTorch modules)
# ---------------------------------------------------------------------------
def mha_block(Q0, Kin, p, num_heads, use_pallas=True):
    lin = pallas_linear if use_pallas else _linear_ref
    sdpa = pallas_sdpa if use_pallas else _sdpa_ref

    Qp = lin(Q0, p["fc_q_w"], p["fc_q_b"])       # [B, Lq, dV]
    Kp = lin(Kin, p["fc_k_w"], p["fc_k_b"])      # [B, Lk, dV]
    Vp = lin(Kin, p["fc_v_w"], p["fc_v_b"])      # [B, Lk, dV]

    # torch nn.MultiheadAttention(dim_V, num_heads): in_proj, SDPA, out_proj.
    q = lin(Qp, p["in_q_w"], p["in_q_b"])
    k = lin(Kp, p["in_k_w"], p["in_k_b"])
    v = lin(Vp, p["in_v_w"], p["in_v_b"])

    b, lq, dv = q.shape
    lk = k.shape[1]
    hd = dv // num_heads
    scale = 1.0 / math.sqrt(hd)

    def split_heads(t, L):
        return (t.reshape(b, L, num_heads, hd)
                  .transpose(0, 2, 1, 3)
                  .reshape(b * num_heads, L, hd))

    oh = sdpa(split_heads(q, lq), split_heads(k, lk), split_heads(v, lk), scale)
    o = (oh.reshape(b, num_heads, lq, hd)
           .transpose(0, 2, 1, 3)
           .reshape(b, lq, dv))
    A = lin(o, p["out_w"], p["out_b"])           # out_proj

    O = Qp + A                                   # residual with projected query
    # ln0 / ln1 skipped: module built with ln=False (LayerNorms not created).
    O = O + lin(O, p["fc_o_w"], p["fc_o_b"], act="relu")
    if "gate_w" in p:                            # gated: O * SiLU(Linear(Q0))
        O = O * lin(Q0, p["gate_w"], p["gate_b"], act="silu")
    return O


def gab_block(X, p, num_heads, use_pallas=True):
    b = X.shape[0]
    latent = jnp.broadcast_to(p["latent"], (b,) + p["latent"].shape[1:])
    H = mha_block(latent, X, p["fwd"], num_heads, use_pallas)
    return mha_block(X, H, p["bwd"], num_heads, use_pallas)


def ilra_forward(X, params, num_heads, use_pallas=True):
    lin = pallas_linear if use_pallas else _linear_ref
    for blk in params["gab_blocks"]:
        X = gab_block(X, blk, num_heads, use_pallas)
    b = X.shape[0]
    S = jnp.broadcast_to(params["nlp"]["S"], (b,) + params["nlp"]["S"].shape[1:])
    feat = mha_block(S, X, params["nlp"]["mha"], num_heads, use_pallas)  # [B, topk, dh]
    logits = lin(feat, params["cls_w"], params["cls_b"])                 # [B, topk, C]
    return jnp.squeeze(logits, axis=1)                                   # topk == 1


# ---------------------------------------------------------------------------
# Parameter construction (deterministic; xavier-like init, zero biases)
# ---------------------------------------------------------------------------
def _xavier(key, shape):
    std = math.sqrt(2.0 / (shape[0] + shape[1]))
    return std * jax.random.normal(key, shape, dtype=jnp.float32)


def make_mha_params(key, dim_q, dim_k, dim_v, gated):
    names = ["fc_q", "fc_k", "fc_v", "in_q", "in_k", "in_v", "out", "fc_o"]
    dims = {
        "fc_q": (dim_q, dim_v), "fc_k": (dim_k, dim_v), "fc_v": (dim_k, dim_v),
        "in_q": (dim_v, dim_v), "in_k": (dim_v, dim_v), "in_v": (dim_v, dim_v),
        "out": (dim_v, dim_v), "fc_o": (dim_v, dim_v),
    }
    if gated:
        names.append("gate")
        dims["gate"] = (dim_q, dim_v)
    keys = jax.random.split(key, len(names))
    p = {}
    for nk, name in zip(keys, names):
        p[name + "_w"] = _xavier(nk, dims[name])
        p[name + "_b"] = jnp.zeros((dims[name][1],), jnp.float32)
    return p


def make_ilra_params(key, dim_in, dim_hid, num_cls, num_layers, topk):
    p = {"gab_blocks": []}
    for idx in range(num_layers):
        d_in = dim_in if idx == 0 else dim_hid
        key, k_lat, k_f, k_b = jax.random.split(key, 4)
        p["gab_blocks"].append({
            "latent": _xavier(k_lat, (topk, dim_hid)).reshape(1, topk, dim_hid),
            "fwd": make_mha_params(k_f, dim_hid, d_in, dim_hid, gated=True),
            "bwd": make_mha_params(k_b, d_in, dim_hid, dim_hid, gated=True),
        })
    key, k_s, k_m, k_c = jax.random.split(key, 4)
    p["nlp"] = {
        "S": _xavier(k_s, (topk, dim_hid)).reshape(1, topk, dim_hid),
        "mha": make_mha_params(k_m, dim_hid, dim_hid, dim_hid, gated=False),
    }
    p["cls_w"] = _xavier(k_c, (dim_hid, num_cls))
    p["cls_b"] = jnp.zeros((num_cls,), jnp.float32)
    return p


# ---------------------------------------------------------------------------
if __name__ == "__main__":
    key = jax.random.PRNGKey(0)
    B, K, dim_in, dim_hid = 2, 16, 64, 32
    num_heads, topk, num_layers, num_cls = 4, 1, 2, 2

    k_x, k_p = jax.random.split(key)
    X = jax.random.normal(k_x, (B, K, dim_in), dtype=jnp.float32)
    params = make_ilra_params(k_p, dim_in, dim_hid, num_cls, num_layers, topk)

    logits = ilra_forward(X, params, num_heads, use_pallas=True)
    jax.block_until_ready(logits)
    assert logits.shape == (B, num_cls), logits.shape

    ref = ilra_forward(X, params, num_heads, use_pallas=False)
    jax.block_until_ready(ref)
    err = float(jnp.max(jnp.abs(logits - ref)))
    assert jnp.allclose(logits, ref, atol=1e-3, rtol=1e-3), f"max abs err {err}"

    print("KERNEL_OK")
</pallas_src>

<mosaic_0001>
module attributes {stable_mosaic.version = 11 : i64} {
  func.func @_linear_kernel(%arg0: i32, %arg1: memref<2x32xf32, #tpu.memory_space<vmem>>, %arg2: memref<32x32xf32, #tpu.memory_space<vmem>>, %arg3: memref<1x32xf32, #tpu.memory_space<vmem>>, %arg4: memref<2x32xf32, #tpu.memory_space<vmem>>) attributes {dimension_semantics = [#tpu.dimension_semantics<parallel>], iteration_bounds = array<i64: 1>, scalar_prefetch = 0 : i64, scratch_operands = 0 : i64, tpu.core_type = #tpu.core_type<tc>, window_params = [{transform_indices = @transform_0, window_bounds = array<i64: 2, 32>}, {pipeline_mode = #tpu.pipeline_mode<synchronous>, transform_indices = @transform_1, window_bounds = array<i64: 32, 32>}, {pipeline_mode = #tpu.pipeline_mode<synchronous>, transform_indices = @transform_2, window_bounds = array<i64: 1, 32>}, {transform_indices = @transform_3, window_bounds = array<i64: 2, 32>}]} {
    %c0 = arith.constant 0 : index
    %c0_0 = arith.constant 0 : index
    %0 = vector.load %arg1[%c0, %c0_0] : memref<2x32xf32, #tpu.memory_space<vmem>>, vector<2x32xf32>
    %c0_1 = arith.constant 0 : index
    %c0_2 = arith.constant 0 : index
    %1 = vector.load %arg2[%c0_1, %c0_2] : memref<32x32xf32, #tpu.memory_space<vmem>>, vector<32x32xf32>
    %cst = arith.constant dense<0.000000e+00> : vector<2x32xf32>
    %2 = tpu.matmul %0, %1, %cst {dimension_numbers = #tpu.dot_dimension_numbers<[1], [0], [0], [1], [0, 0, 1, 1], [], []>} : vector<2x32xf32>, vector<32x32xf32>, vector<2x32xf32> -> vector<2x32xf32>
    %c0_3 = arith.constant 0 : index
    %c0_4 = arith.constant 0 : index
    %3 = vector.load %arg3[%c0_3, %c0_4] : memref<1x32xf32, #tpu.memory_space<vmem>>, vector<1x32xf32>
    %4 = vector.broadcast %3 : vector<1x32xf32> to vector<2x32xf32>
    %5 = arith.addf %2, %4 : vector<2x32xf32>
    %c0_5 = arith.constant 0 : index
    %c0_6 = arith.constant 0 : index
    %6 = vector.load %arg4[%c0_5, %c0_6] : memref<2x32xf32, #tpu.memory_space<vmem>>, vector<2x32xf32>
    tpu.vector_store %arg4[%c0_5, %c0_6], %5 {strides = array<i32>} : memref<2x32xf32, #tpu.memory_space<vmem>>, vector<2x32xf32>,
    return
  }
  func.func @transform_0(%arg0: i32) -> (i32, i32) {
    %c0_i32 = arith.constant 0 : i32
    %c0_i32_0 = arith.constant 0 : i32
    return %arg0, %c0_i32 : i32, i32
  }
  func.func @transform_1(%arg0: i32) -> (i32, i32) {
    %c0_i32 = arith.constant 0 : i32
    %c0_i32_0 = arith.constant 0 : i32
    %c0_i32_1 = arith.constant 0 : i32
    return %c0_i32, %c0_i32_0 : i32, i32
  }
  func.func @transform_2(%arg0: i32) -> (i32, i32) {
    %c0_i32 = arith.constant 0 : i32
    %c0_i32_0 = arith.constant 0 : i32
    %c0_i32_1 = arith.constant 0 : i32
    return %c0_i32, %c0_i32_0 : i32, i32
  }
  func.func @transform_3(%arg0: i32) -> (i32, i32) {
    %c0_i32 = arith.constant 0 : i32
    %c0_i32_0 = arith.constant 0 : i32
    return %arg0, %c0_i32 : i32, i32
  }
}

</mosaic_0001>

<llo_original>
// kernel: tpu_custom_call.1
$region0: #{tpu_custom_call.1}
  #allocation0 [shape = 'u32[]', space=smem, size = 0x4, offset = 0x4, fixed_abs, tag = 'smem constant byte address 0x4 - core index']
  #allocation1 [shape = 'u32[144,128]{1,0:T(1,128)}', space=vmem, size = 0x12000, scoped, tag = 'internal scratch']
  %s0 = inlined_call_operand.hbm [shape: f32[2,32], index: 0, kind: input, shape index: {}]
  %s1 = inlined_call_operand.hbm [shape: f32[32,32], index: 1, kind: input, shape index: {}]
  %s2 = inlined_call_operand.vmem [shape: f32[1,32], index: 2, kind: input, shape index: {}]
  %s3 = inlined_call_operand.hbm [shape: f32[2,32], index: 3, kind: output, shape index: {}]
  %s4 = sld [smem:[#allocation0]]
  $region30: #{tpu_custom_call.1} parent=0
    _
  %s6 = ssub.s32 1, %s4
  %s7 = scalar_select 0, %s6, %s4
  $region1: #{tpu_custom_call.1} parent=0
    #allocation2 [shape = 'u8[1024]{0}', space=vmem, size = 0x400, scoped, tag = 'input window, operand 0, single buffered']
    #allocation3 [shape = 's32[1]{0}', space=sflag, size = 0x4, scoped, tag = 'scoped memory for tpu_custom_call.1']
    #allocation4 [shape = 's32[1]{0}', space=sflag, size = 0x4, scoped, tag = 'scoped memory for tpu_custom_call.1']
    #allocation5 [shape = 'u8[16384]{0}', space=vmem, size = 0x4000, scoped, tag = 'input window, operand 1, single buffered']
    #allocation6 [shape = 's32[1]{0}', space=sflag, size = 0x4, scoped, tag = 'scoped memory for tpu_custom_call.1']
    #allocation7 [shape = 'u8[1024]{0}', space=vmem, size = 0x400, scoped, tag = 'output window, operand 0, single buffered']
    %8 = vsyncpa [#allocation3], 0
    %9 = vsyncpa [#allocation6], 0
    %10 = vsyncpa [#allocation4], 0
    // Predicated region
    $region2: #{tpu_custom_call.1} parent=1 // pred_check
      _
    $region3: #{tpu_custom_call.1} parent=1 // pred_check_branch
      %12 = sbr.rel (0) target = $region5
    $region4: #{tpu_custom_call.1} parent=1 // pred_region
      %s14 = ssub.s32 32, 32
      %15 = vsyncadd [#allocation3], %s14
      %s17 = sshll.u32 [#allocation2], 4
      %s18 = int_to_ptr.vmem [resolvable:$true] %s17
      %20 = dma.hbm_to_vmem [thread:$0]  %s0, 32, %s18, [#allocation3]
    $region5: #{tpu_custom_call.1} parent=1 // pred_fallthru
      _
    // Predicated region
    $region6: #{tpu_custom_call.1} parent=1 // pred_check
      _
    $region7: #{tpu_custom_call.1} parent=1 // pred_check_branch
      %22 = sbr.rel (0) target = $region9
    $region8: #{tpu_custom_call.1} parent=1 // pred_region
      %s24 = ssub.s32 512, 512
      %25 = vsyncadd [#allocation6], %s24
      %s26 = sshll.u32 [#allocation5], 4
      %s27 = int_to_ptr.vmem [resolvable:$true] %s26
      %32 = dma.hbm_to_vmem [thread:$0]  %s1, 512, %s27, [#allocation6], 128, 128, 8
    $region9: #{tpu_custom_call.1} parent=1 // pred_fallthru
      _
    // Predicated region
    $region10: #{tpu_custom_call.1} parent=1 // pred_check
      _
    $region11: #{tpu_custom_call.1} parent=1 // pred_check_branch
      %34 = sbr.rel (0) target = $region13
    $region12: #{tpu_custom_call.1} parent=1 // pred_region
      _
    $region13: #{tpu_custom_call.1} parent=1 // pred_fallthru
      _
    // Predicated region
    $region14: #{tpu_custom_call.1} parent=1 // pred_check
      _
    $region15: #{tpu_custom_call.1} parent=1 // pred_check_branch
      %36 = sbr.rel (0) target = $region17
    $region16: #{tpu_custom_call.1} parent=1 // pred_region
      %37 = dma.done [#allocation3], 32
    $region17: #{tpu_custom_call.1} parent=1 // pred_fallthru
      _
    // Predicated region
    $region18: #{tpu_custom_call.1} parent=1 // pred_check
      _
    $region19: #{tpu_custom_call.1} parent=1 // pred_check_branch
      %39 = sbr.rel (0) target = $region21
    $region20: #{tpu_custom_call.1} parent=1 // pred_region
      %40 = dma.done [#allocation6], 512
    $region21: #{tpu_custom_call.1} parent=1 // pred_fallthru
      _
    %v41 = vld [vmem:[#allocation2] sm:$0x3]
    %v42 = vld [vmem:[#allocation5] sm:$0xff]
    %v43 = vld [vmem:[#allocation5 + $0x8] sm:$0xff]
    %v44 = vld [vmem:[#allocation5 + $0x10] sm:$0xff]
    %v45 = vld [vmem:[#allocation5 + $0x18] sm:$0xff]
    %v46 = vld [vmem:[%s2] sm:$0x1]
    %v48 = vlaneseq
    %v49 = vshrl.u32 %v48, 7
    %v50 = vsub.s32 0, %v49
    %v51 = vrot.slane %v46, %v50
    %vm53 = vcmask 261120
    %v55 = vsel %vm53, %v41, 0
    %57 = vmatprep.subr.mxu0 0.0
    %58 = vmatpush1.msra.mxu0 0.0
    %59 = vmatprep.subr.mxu0 0.0
    %60 = vmatpush1.msra.mxu0 0.0
    %61 = vmatprep.subr.mxu0 0.0
    %62 = vmatpush1.msra.mxu0 0.0
    %63 = vmatprep.subr.mxu0 0.0
    %64 = vmatpush1.msra.mxu0 0.0
    %65 = vmatprep.subr.mxu0 0.0
    %66 = vmatpush1.msra.mxu0 0.0
    %67 = vmatprep.subr.mxu0 0.0
    %68 = vmatpush1.msra.mxu0 0.0
    %69 = vmatprep.subr.mxu0 0.0
    %70 = vmatpush1.msra.mxu0 0.0
    %71 = vmatprep.subr.mxu0 0.0
    %72 = vmatpush1.msra.mxu0 0.0
    %73 = vmatprep.subr.mxu0 0.0
    %74 = vmatpush1.msra.mxu0 0.0
    %75 = vmatprep.subr.mxu0 0.0
    %76 = vmatpush1.msra.mxu0 0.0
    %77 = vmatprep.subr.mxu0 0.0
    %78 = vmatpush1.msra.mxu0 0.0
    %79 = vmatprep.subr.mxu0 0.0
    %80 = vmatpush1.msra.mxu0 0.0
    %81 = vmatprep.subr.mxu0 0.0
    %82 = vmatpush1.msra.mxu0 %v45
    %83 = vmatprep.subr.mxu0 0.0
    %84 = vmatpush1.msra.mxu0 %v44
    %85 = vmatprep.subr.mxu0 0.0
    %86 = vmatpush1.msra.mxu0 %v43
    %87 = vmatprep.subr.mxu0 0.0
    %88 = vmatpush1.msra.mxu0 %v42
    %89 = vmatprep.subr.mxu0 0.0
    %90 = vmatpush2.msra.mxu0 0.0
    %91 = vmatprep.subr.mxu0 0.0
    %92 = vmatpush2.msra.mxu0 0.0
    %93 = vmatprep.subr.mxu0 0.0
    %94 = vmatpush2.msra.mxu0 0.0
    %95 = vmatprep.subr.mxu0 0.0
    %96 = vmatpush2.msra.mxu0 0.0
    %97 = vmatprep.subr.mxu0 0.0
    %98 = vmatpush2.msra.mxu0 0.0
    %99 = vmatprep.subr.mxu0 0.0
    %100 = vmatpush2.msra.mxu0 0.0
    %101 = vmatprep.subr.mxu0 0.0
    %102 = vmatpush2.msra.mxu0 0.0
    %103 = vmatprep.subr.mxu0 0.0
    %104 = vmatpush2.msra.mxu0 0.0
    %105 = vmatprep.subr.mxu0 0.0
    %106 = vmatpush2.msra.mxu0 0.0
    %107 = vmatprep.subr.mxu0 0.0
    %108 = vmatpush2.msra.mxu0 0.0
    %109 = vmatprep.subr.mxu0 0.0
    %110 = vmatpush2.msra.mxu0 0.0
    %111 = vmatprep.subr.mxu0 0.0
    %112 = vmatpush2.msra.mxu0 0.0
    %113 = vmatprep.subr.mxu0 0.0
    %114 = vmatpush2.msra.mxu0 0.0
    %115 = vmatprep.subr.mxu0 0.0
    %116 = vmatpush2.msra.mxu0 0.0
    %117 = vmatprep.subr.mxu0 0.0
    %118 = vmatpush2.msra.mxu0 0.0
    %119 = vmatprep.subr.mxu0 0.0
    %120 = vmatpush2.msra.mxu0 0.0
    %121 = vmatprep.mubr.f32.mxu0 0.0
    %122 = vmatmul.mubr.f32.gmra.mxu0 %v55
    %v123 = vpop.f32.mrf.mxu0
    %v124 = vadd.f32 %v51, %v123
    %v125 = vpop.f32.mrf.mxu0
    %126 = vdwg.mxu0
    %vm127 = vcmask 254976
    %128 = vst.msk [vmem:[#allocation7] sm:$0x3] %vm127, %v124
    // Predicated region
    $region22: #{tpu_custom_call.1} parent=1 // pred_check
      _
    $region23: #{tpu_custom_call.1} parent=1 // pred_check_branch
      %130 = sbr.rel (0) target = $region25
    $region24: #{tpu_custom_call.1} parent=1 // pred_region
      %s132 = ssub.s32 32, 32
      %133 = vsyncadd [#allocation4], %s132
      %s135 = sshll.u32 [#allocation7], 4
      %s136 = int_to_ptr.vmem [resolvable:$true] %s135
      %138 = dma.vmem_to_hbm [thread:$0]  %s136, 32, %s3, [#allocation4]
    $region25: #{tpu_custom_call.1} parent=1 // pred_fallthru
      _
    // Predicated region
    $region26: #{tpu_custom_call.1} parent=1 // pred_check
      _
    $region27: #{tpu_custom_call.1} parent=1 // pred_check_branch
      %140 = sbr.rel (0) target = $region29
    $region28: #{tpu_custom_call.1} parent=1 // pred_region
      %141 = dma.done [#allocation4], 32
    $region29: #{tpu_custom_call.1} parent=1 // pred_fallthru
      _
    %142 = vsyncpa [#allocation3], 1
    %143 = vsyncpa [#allocation6], 1
    %144 = vsyncpa [#allocation4], 1

</llo_original>
